<compile_context>
chip_gen: v7x
topology: tpu7x:2x2x1
jax: 0.10.0
libtpu: 0.0.40
codegen_flags: <defaults>
</compile_context>

<pallas_src>
import jax
import jax.numpy as jnp
from jax import lax
from jax.experimental import pallas as pl
from jax.experimental.pallas import tpu as pltpu

EPS = 1e-8


def _make_ranking_loss_kernel(margin, reduction, true_batch, tb, needs_mask):
    margin = float(margin)

    def kernel(ip_ref, cp_ref, ineg_ref, cneg_ref, out_ref):
        pid = pl.program_id(0)

        ip = ip_ref[...].astype(jnp.float32)      # image_pos   [tb, D]
        cp = cp_ref[...].astype(jnp.float32)      # caption_pos [tb, D]
        ineg = ineg_ref[...].astype(jnp.float32)  # image_neg   [tb, D]
        cneg = cneg_ref[...].astype(jnp.float32)  # caption_neg [tb, D]

        # Row-wise dot products (each used once).
        dot_pp = jnp.sum(ip * cp, axis=1, keepdims=True)
        dot_pn = jnp.sum(ip * cneg, axis=1, keepdims=True)
        dot_ci = jnp.sum(cp * ineg, axis=1, keepdims=True)

        # Squared norms, each computed exactly once and shared.
        sq_ip = jnp.sum(ip * ip, axis=1, keepdims=True)
        sq_cp = jnp.sum(cp * cp, axis=1, keepdims=True)
        sq_in = jnp.sum(ineg * ineg, axis=1, keepdims=True)
        sq_cn = jnp.sum(cneg * cneg, axis=1, keepdims=True)

        # 1 / max(||x||, eps) == rsqrt(max(||x||^2, eps^2))   (EUP slot)
        inv_ip = lax.rsqrt(jnp.maximum(sq_ip, EPS * EPS))
        inv_cp = lax.rsqrt(jnp.maximum(sq_cp, EPS * EPS))
        inv_in = lax.rsqrt(jnp.maximum(sq_in, EPS * EPS))
        inv_cn = lax.rsqrt(jnp.maximum(sq_cn, EPS * EPS))

        cos_pp = dot_pp * (inv_ip * inv_cp)   # cos(image_pos, caption_pos)
        cos_pn = dot_pn * (inv_ip * inv_cn)   # cos(image_pos, caption_neg)
        cos_ci = dot_ci * (inv_cp * inv_in)   # cos(caption_pos, image_neg)

        image_anchor = jnp.maximum(margin - (cos_pp - cos_pn), 0.0)
        caption_anchor = jnp.maximum(margin - (cos_pp - cos_ci), 0.0)
        loss = image_anchor + caption_anchor                 # [tb, 1]

        if needs_mask:
            # Partial edge block: rows past the true batch contain garbage
            # (possibly NaN/Inf); select discards them safely.
            rows = pid * tb + lax.broadcasted_iota(jnp.int32, (tb, 1), 0)
            loss = jnp.where(rows < true_batch, loss, 0.0)

        if reduction == "none":
            # Lane-dense [1, tb] row -> unmasked full-vreg stores.
            out_ref[...] = jnp.transpose(loss)
        else:
            # Per-tile partial sum; final reduce happens in the wrapper so the
            # grid axis stays 'parallel' (v7x megacore can split the stream).
            out_ref[...] = jnp.sum(loss, axis=0, keepdims=True)   # [1, 1]

    return kernel


def _vmem_capacity_bytes():
    try:
        return int(pltpu.get_tpu_info().vmem_capacity_bytes)
    except Exception:
        return 64 * 1024 * 1024   # conservative (v7x-sized) fallback


def ranking_loss(image_pos, caption_pos, image_neg, caption_neg,
                 margin=1.0, reduction="mean"):
    """All inputs: [batch, dim] (f32 or bf16). Returns a scalar for
    'mean'/'sum', or the per-sample loss [batch] for 'none'."""
    if reduction not in ("mean", "sum", "none"):
        raise Exception("Unexpected reduction {}".format(reduction))

    batch, dim = image_pos.shape
    assert caption_pos.shape == (batch, dim)
    assert image_neg.shape == (batch, dim)
    assert caption_neg.shape == (batch, dim)

    # --- generation-aware batch-tile selection --------------------------------
    vmem_cap = _vmem_capacity_bytes()
    if vmem_cap >= 96 * 1024 * 1024:      # v5e / v6e: 128 MiB physical VMEM
        working_budget = 56 * 1024 * 1024
        tb_cap = 1024
        vmem_limit = 100 * 1024 * 1024
    else:                                  # v7x: 64 MiB physical / 32 MiB scoped
        working_budget = 20 * 1024 * 1024
        tb_cap = 512
        vmem_limit = 40 * 1024 * 1024

    in_itemsize = jnp.dtype(image_pos.dtype).itemsize
    # Per tile-row: 4 input streams x 2 pipeline buffers (input dtype) plus
    # headroom for ~6 tile-sized f32 working values (f32 casts / products) in
    # case Mosaic does not fully fuse them into the lane reductions.
    bytes_per_row = dim * (4 * 2 * in_itemsize + 6 * 4)
    max_tb = max(8, (working_budget // bytes_per_row) // 8 * 8)

    ceil8_batch = ((batch + 7) // 8) * 8
    tb = max(8, min(ceil8_batch, tb_cap, max_tb))   # multiple of 8 by construction
    num_tiles = int(pl.cdiv(batch, tb))
    needs_mask = (batch % tb) != 0                  # last tile is a partial block

    in_spec = pl.BlockSpec((tb, dim), lambda i: (i, 0))

    if reduction == "none":
        out_shape = jax.ShapeDtypeStruct((num_tiles, tb), jnp.float32)
        out_spec = pl.BlockSpec((1, tb), lambda i: (i, 0))
    else:
        out_shape = jax.ShapeDtypeStruct((num_tiles, 1), jnp.float32)
        out_spec = pl.BlockSpec((1, 1), lambda i: (i, 0))

    kernel = _make_ranking_loss_kernel(margin, reduction, batch, tb, needs_mask)

    result = pl.pallas_call(
        kernel,
        out_shape=out_shape,
        grid_spec=pltpu.PrefetchScalarGridSpec(
            num_scalar_prefetch=0,
            grid=(num_tiles,),
            in_specs=[in_spec, in_spec, in_spec, in_spec],
            out_specs=out_spec,
        ),
        compiler_params=pltpu.CompilerParams(
            dimension_semantics=("parallel",),
            vmem_limit_bytes=vmem_limit,
        ),
    )(image_pos, caption_pos, image_neg, caption_neg)

    if reduction == "none":
        return result.reshape(-1)[:batch]
    total = jnp.sum(result)          # tiny (num_tiles,) reduce in the wrapper
    if reduction == "mean":
        return total / batch
    return total


# ------------------------------- reference ----------------------------------
def _ranking_loss_ref(ip, cp, ineg, cneg, margin=1.0, reduction="mean"):
    def cos(a, b):
        dot = jnp.sum(a * b, axis=1)
        na = jnp.maximum(jnp.linalg.norm(a, axis=1), EPS)
        nb = jnp.maximum(jnp.linalg.norm(b, axis=1), EPS)
        return dot / (na * nb)

    image_anchor = jnp.maximum(margin - (cos(ip, cp) - cos(ip, cneg)), 0.0)
    caption_anchor = jnp.maximum(margin - (cos(cp, ip) - cos(cp, ineg)), 0.0)
    loss = image_anchor + caption_anchor
    if reduction == "mean":
        return loss.mean()
    elif reduction == "sum":
        return loss.sum()
    return loss


if __name__ == "__main__":
    key = jax.random.PRNGKey(0)
    k1, k2, k3, k4 = jax.random.split(key, 4)
    batch, dim = 8, 32

    image_pos = jax.random.normal(k1, (batch, dim), dtype=jnp.float32)
    caption_pos = jax.random.normal(k2, (batch, dim), dtype=jnp.float32)
    image_neg = jax.random.normal(k3, (batch, dim), dtype=jnp.float32)
    caption_neg = jax.random.normal(k4, (batch, dim), dtype=jnp.float32)

    # mean / sum / none reductions
    for red in ("mean", "sum", "none"):
        out = ranking_loss(image_pos, caption_pos, image_neg, caption_neg,
                           margin=1.0, reduction=red)
        out = jax.block_until_ready(out)
        ref = _ranking_loss_ref(image_pos, caption_pos, image_neg, caption_neg,
                                margin=1.0, reduction=red)
        assert jnp.allclose(out, ref, atol=2e-5, rtol=2e-5), (red, out, ref)

    # ragged batch (exercises partial edge block + row masking, no jnp.pad)
    b2 = 5
    for red in ("mean", "none"):
        out = ranking_loss(image_pos[:b2], caption_pos[:b2], image_neg[:b2],
                           caption_neg[:b2], margin=1.0, reduction=red)
        out = jax.block_until_ready(out)
        ref = _ranking_loss_ref(image_pos[:b2], caption_pos[:b2], image_neg[:b2],
                                caption_neg[:b2], margin=1.0, reduction=red)
        assert jnp.allclose(out, ref, atol=2e-5, rtol=2e-5), (red, out, ref)

    print("KERNEL_OK")
</pallas_src>

<mosaic_0001>
module attributes {stable_mosaic.version = 11 : i64} {
  func.func @kernel(%arg0: i32, %arg1: memref<8x32xf32, #tpu.memory_space<vmem>>, %arg2: memref<8x32xf32, #tpu.memory_space<vmem>>, %arg3: memref<8x32xf32, #tpu.memory_space<vmem>>, %arg4: memref<8x32xf32, #tpu.memory_space<vmem>>, %arg5: memref<1x1xf32, #tpu.memory_space<vmem>>) attributes {dimension_semantics = [#tpu.dimension_semantics<parallel>], iteration_bounds = array<i64: 1>, scalar_prefetch = 0 : i64, scratch_operands = 0 : i64, tpu.core_type = #tpu.core_type<tc>, window_params = [{transform_indices = @transform_0, window_bounds = array<i64: 8, 32>}, {transform_indices = @transform_1, window_bounds = array<i64: 8, 32>}, {transform_indices = @transform_2, window_bounds = array<i64: 8, 32>}, {transform_indices = @transform_3, window_bounds = array<i64: 8, 32>}, {transform_indices = @transform_4, window_bounds = array<i64: 1, 1>}]} {
    %c0 = arith.constant 0 : index
    %c0_0 = arith.constant 0 : index
    %0 = vector.load %arg1[%c0, %c0_0] : memref<8x32xf32, #tpu.memory_space<vmem>>, vector<8x32xf32>
    %c0_1 = arith.constant 0 : index
    %c0_2 = arith.constant 0 : index
    %1 = vector.load %arg2[%c0_1, %c0_2] : memref<8x32xf32, #tpu.memory_space<vmem>>, vector<8x32xf32>
    %c0_3 = arith.constant 0 : index
    %c0_4 = arith.constant 0 : index
    %2 = vector.load %arg3[%c0_3, %c0_4] : memref<8x32xf32, #tpu.memory_space<vmem>>, vector<8x32xf32>
    %c0_5 = arith.constant 0 : index
    %c0_6 = arith.constant 0 : index
    %3 = vector.load %arg4[%c0_5, %c0_6] : memref<8x32xf32, #tpu.memory_space<vmem>>, vector<8x32xf32>
    %4 = arith.mulf %0, %1 : vector<8x32xf32>
    %cst = arith.constant dense<0.000000e+00> : vector<8xf32>
    %5 = vector.multi_reduction <add>, %4, %cst [1] : vector<8x32xf32> to vector<8xf32>
    %6 = vector.shape_cast %5 : vector<8xf32> to vector<8x1xf32>
    %7 = arith.mulf %0, %3 : vector<8x32xf32>
    %cst_7 = arith.constant dense<0.000000e+00> : vector<8xf32>
    %8 = vector.multi_reduction <add>, %7, %cst_7 [1] : vector<8x32xf32> to vector<8xf32>
    %9 = vector.shape_cast %8 : vector<8xf32> to vector<8x1xf32>
    %10 = arith.mulf %1, %2 : vector<8x32xf32>
    %cst_8 = arith.constant dense<0.000000e+00> : vector<8xf32>
    %11 = vector.multi_reduction <add>, %10, %cst_8 [1] : vector<8x32xf32> to vector<8xf32>
    %12 = vector.shape_cast %11 : vector<8xf32> to vector<8x1xf32>
    %13 = arith.mulf %0, %0 : vector<8x32xf32>
    %cst_9 = arith.constant dense<0.000000e+00> : vector<8xf32>
    %14 = vector.multi_reduction <add>, %13, %cst_9 [1] : vector<8x32xf32> to vector<8xf32>
    %15 = vector.shape_cast %14 : vector<8xf32> to vector<8x1xf32>
    %16 = arith.mulf %1, %1 : vector<8x32xf32>
    %cst_10 = arith.constant dense<0.000000e+00> : vector<8xf32>
    %17 = vector.multi_reduction <add>, %16, %cst_10 [1] : vector<8x32xf32> to vector<8xf32>
    %18 = vector.shape_cast %17 : vector<8xf32> to vector<8x1xf32>
    %19 = arith.mulf %2, %2 : vector<8x32xf32>
    %cst_11 = arith.constant dense<0.000000e+00> : vector<8xf32>
    %20 = vector.multi_reduction <add>, %19, %cst_11 [1] : vector<8x32xf32> to vector<8xf32>
    %21 = vector.shape_cast %20 : vector<8xf32> to vector<8x1xf32>
    %22 = arith.mulf %3, %3 : vector<8x32xf32>
    %cst_12 = arith.constant dense<0.000000e+00> : vector<8xf32>
    %23 = vector.multi_reduction <add>, %22, %cst_12 [1] : vector<8x32xf32> to vector<8xf32>
    %24 = vector.shape_cast %23 : vector<8xf32> to vector<8x1xf32>
    %cst_13 = arith.constant 1.000000e-16 : f32
    %25 = vector.broadcast %cst_13 : f32 to vector<8x1xf32>
    %26 = arith.maximumf %15, %25 : vector<8x1xf32>
    %27 = math.rsqrt %26 : vector<8x1xf32>
    %cst_14 = arith.constant 1.000000e-16 : f32
    %28 = vector.broadcast %cst_14 : f32 to vector<8x1xf32>
    %29 = arith.maximumf %18, %28 : vector<8x1xf32>
    %30 = math.rsqrt %29 : vector<8x1xf32>
    %cst_15 = arith.constant 1.000000e-16 : f32
    %31 = vector.broadcast %cst_15 : f32 to vector<8x1xf32>
    %32 = arith.maximumf %21, %31 : vector<8x1xf32>
    %33 = math.rsqrt %32 : vector<8x1xf32>
    %cst_16 = arith.constant 1.000000e-16 : f32
    %34 = vector.broadcast %cst_16 : f32 to vector<8x1xf32>
    %35 = arith.maximumf %24, %34 : vector<8x1xf32>
    %36 = math.rsqrt %35 : vector<8x1xf32>
    %37 = arith.mulf %27, %30 : vector<8x1xf32>
    %38 = arith.mulf %6, %37 : vector<8x1xf32>
    %39 = arith.mulf %27, %36 : vector<8x1xf32>
    %40 = arith.mulf %9, %39 : vector<8x1xf32>
    %41 = arith.mulf %30, %33 : vector<8x1xf32>
    %42 = arith.mulf %12, %41 : vector<8x1xf32>
    %43 = arith.subf %38, %40 : vector<8x1xf32>
    %cst_17 = arith.constant 1.000000e+00 : f32
    %44 = vector.broadcast %cst_17 : f32 to vector<8x1xf32>
    %45 = arith.subf %44, %43 : vector<8x1xf32>
    %cst_18 = arith.constant 0.000000e+00 : f32
    %46 = vector.broadcast %cst_18 : f32 to vector<8x1xf32>
    %47 = arith.maximumf %45, %46 : vector<8x1xf32>
    %48 = arith.subf %38, %42 : vector<8x1xf32>
    %cst_19 = arith.constant 1.000000e+00 : f32
    %49 = vector.broadcast %cst_19 : f32 to vector<8x1xf32>
    %50 = arith.subf %49, %48 : vector<8x1xf32>
    %cst_20 = arith.constant 0.000000e+00 : f32
    %51 = vector.broadcast %cst_20 : f32 to vector<8x1xf32>
    %52 = arith.maximumf %50, %51 : vector<8x1xf32>
    %53 = arith.addf %47, %52 : vector<8x1xf32>
    %cst_21 = arith.constant dense<0.000000e+00> : vector<1xf32>
    %54 = vector.multi_reduction <add>, %53, %cst_21 [0] : vector<8x1xf32> to vector<1xf32>
    %55 = vector.shape_cast %54 : vector<1xf32> to vector<1x1xf32>
    %c0_22 = arith.constant 0 : index
    %c0_23 = arith.constant 0 : index
    %56 = vector.load %arg5[%c0_22, %c0_23] : memref<1x1xf32, #tpu.memory_space<vmem>>, vector<1x1xf32>
    tpu.vector_store %arg5[%c0_22, %c0_23], %55 {strides = array<i32>} : memref<1x1xf32, #tpu.memory_space<vmem>>, vector<1x1xf32>,
    return
  }
  func.func @transform_0(%arg0: i32) -> (i32, i32) {
    %c0_i32 = arith.constant 0 : i32
    %c0_i32_0 = arith.constant 0 : i32
    return %arg0, %c0_i32 : i32, i32
  }
  func.func @transform_1(%arg0: i32) -> (i32, i32) {
    %c0_i32 = arith.constant 0 : i32
    %c0_i32_0 = arith.constant 0 : i32
    return %arg0, %c0_i32 : i32, i32
  }
  func.func @transform_2(%arg0: i32) -> (i32, i32) {
    %c0_i32 = arith.constant 0 : i32
    %c0_i32_0 = arith.constant 0 : i32
    return %arg0, %c0_i32 : i32, i32
  }
  func.func @transform_3(%arg0: i32) -> (i32, i32) {
    %c0_i32 = arith.constant 0 : i32
    %c0_i32_0 = arith.constant 0 : i32
    return %arg0, %c0_i32 : i32, i32
  }
  func.func @transform_4(%arg0: i32) -> (i32, i32) {
    %c0_i32 = arith.constant 0 : i32
    %c0_i32_0 = arith.constant 0 : i32
    return %arg0, %c0_i32 : i32, i32
  }
}

</mosaic_0001>

<llo_original>
// kernel: tpu_custom_call.1
$region0: #{tpu_custom_call.1}
  #allocation0 [shape = 'u32[]', space=smem, size = 0x4, offset = 0x4, fixed_abs, tag = 'smem constant byte address 0x4 - core index']
  #allocation1 [shape = 'u32[144,128]{1,0:T(1,128)}', space=vmem, size = 0x12000, scoped, tag = 'internal scratch']
  %s0 = inlined_call_operand.hbm [shape: f32[8,32], index: 0, kind: input, shape index: {}]
  %s1 = inlined_call_operand.hbm [shape: f32[8,32], index: 1, kind: input, shape index: {}]
  %s2 = inlined_call_operand.hbm [shape: f32[8,32], index: 2, kind: input, shape index: {}]
  %s3 = inlined_call_operand.vmem [shape: f32[8,32], index: 3, kind: input, shape index: {}]
  %s4 = inlined_call_operand.hbm [shape: f32[1,1], index: 4, kind: output, shape index: {}]
  %s5 = sld [smem:[#allocation0]]
  $region38: #{tpu_custom_call.1} parent=0
    _
  %s7 = ssub.s32 1, %s5
  %s8 = scalar_select 0, %s7, %s5
  $region1: #{tpu_custom_call.1} parent=0
    #allocation2 [shape = 'u8[4096]{0}', space=vmem, size = 0x1000, scoped, tag = 'input window, operand 0, single buffered']
    #allocation3 [shape = 's32[1]{0}', space=sflag, size = 0x4, scoped, tag = 'scoped memory for tpu_custom_call.1']
    #allocation4 [shape = 's32[1]{0}', space=sflag, size = 0x4, scoped, tag = 'scoped memory for tpu_custom_call.1']
    #allocation5 [shape = 'u8[4096]{0}', space=vmem, size = 0x1000, scoped, tag = 'input window, operand 1, single buffered']
    #allocation6 [shape = 's32[1]{0}', space=sflag, size = 0x4, scoped, tag = 'scoped memory for tpu_custom_call.1']
    #allocation7 [shape = 'u8[4096]{0}', space=vmem, size = 0x1000, scoped, tag = 'input window, operand 2, single buffered']
    #allocation8 [shape = 'u8[512]{0}', space=vmem, size = 0x400, scoped, tag = 'output window, operand 0, single buffered']
    %9 = vsyncpa [#allocation3], 0
    %10 = vsyncpa [#allocation6], 0
    %11 = vsyncpa [#allocation4], 0
    // Predicated region
    $region2: #{tpu_custom_call.1} parent=1 // pred_check
      _
    $region3: #{tpu_custom_call.1} parent=1 // pred_check_branch
      %13 = sbr.rel (0) target = $region5
    $region4: #{tpu_custom_call.1} parent=1 // pred_region
      %s15 = ssub.s32 128, 128
      %16 = vsyncadd [#allocation3], %s15
      %s18 = sshll.u32 [#allocation2], 4
      %s19 = int_to_ptr.vmem [resolvable:$true] %s18
      %21 = dma.hbm_to_vmem [thread:$0]  %s0, 128, %s19, [#allocation3]
    $region5: #{tpu_custom_call.1} parent=1 // pred_fallthru
      _
    // Predicated region
    $region6: #{tpu_custom_call.1} parent=1 // pred_check
      _
    $region7: #{tpu_custom_call.1} parent=1 // pred_check_branch
      %23 = sbr.rel (0) target = $region9
    $region8: #{tpu_custom_call.1} parent=1 // pred_region
      %s25 = ssub.s32 128, 128
      %26 = vsyncadd [#allocation6], %s25
      %s28 = sshll.u32 [#allocation5], 4
      %s29 = int_to_ptr.vmem [resolvable:$true] %s28
      %31 = dma.hbm_to_vmem [thread:$0]  %s1, 128, %s29, [#allocation6]
    $region9: #{tpu_custom_call.1} parent=1 // pred_fallthru
      _
    // Predicated region
    $region10: #{tpu_custom_call.1} parent=1 // pred_check
      _
    $region11: #{tpu_custom_call.1} parent=1 // pred_check_branch
      %33 = sbr.rel (0) target = $region13
    $region12: #{tpu_custom_call.1} parent=1 // pred_region
      %s35 = ssub.s32 128, 128
      %36 = vsyncadd [#allocation6], %s35
      %s38 = sshll.u32 [#allocation7], 4
      %s39 = int_to_ptr.vmem [resolvable:$true] %s38
      %41 = dma.hbm_to_vmem [thread:$0]  %s2, 128, %s39, [#allocation6]
    $region13: #{tpu_custom_call.1} parent=1 // pred_fallthru
      _
    // Predicated region
    $region14: #{tpu_custom_call.1} parent=1 // pred_check
      _
    $region15: #{tpu_custom_call.1} parent=1 // pred_check_branch
      %43 = sbr.rel (0) target = $region17
    $region16: #{tpu_custom_call.1} parent=1 // pred_region
      _
    $region17: #{tpu_custom_call.1} parent=1 // pred_fallthru
      _
    // Predicated region
    $region18: #{tpu_custom_call.1} parent=1 // pred_check
      _
    $region19: #{tpu_custom_call.1} parent=1 // pred_check_branch
      %45 = sbr.rel (0) target = $region21
    $region20: #{tpu_custom_call.1} parent=1 // pred_region
      %46 = dma.done [#allocation3], 128
    $region21: #{tpu_custom_call.1} parent=1 // pred_fallthru
      _
    // Predicated region
    $region22: #{tpu_custom_call.1} parent=1 // pred_check
      _
    $region23: #{tpu_custom_call.1} parent=1 // pred_check_branch
      %48 = sbr.rel (0) target = $region25
    $region24: #{tpu_custom_call.1} parent=1 // pred_region
      %49 = dma.done [#allocation6], 128
    $region25: #{tpu_custom_call.1} parent=1 // pred_fallthru
      _
    // Predicated region
    $region26: #{tpu_custom_call.1} parent=1 // pred_check
      _
    $region27: #{tpu_custom_call.1} parent=1 // pred_check_branch
      %51 = sbr.rel (0) target = $region29
    $region28: #{tpu_custom_call.1} parent=1 // pred_region
      %52 = dma.done [#allocation6], 128
    $region29: #{tpu_custom_call.1} parent=1 // pred_fallthru
      _
    %v53 = vld [vmem:[#allocation2] sm:$0xff]
    %v54 = vld [vmem:[#allocation5] sm:$0xff]
    %v55 = vld [vmem:[#allocation7] sm:$0xff]
    %v56 = vld [vmem:[%s3] sm:$0xff]
    %v57 = vmul.f32 %v53, %v54
    %vm58 = vcmask 261120
    %v59 = vsel %vm58, %v57, 0.0
    %60 = vadd.xlane.f32.xlu0 %v59
    %v61 = vpop.xlane.xlu0 %60
    %v62 = vmul.f32 %v53, %v56
    %v63 = vsel %vm58, %v62, 0.0
    %64 = vadd.xlane.f32.xlu0 %v63
    %v65 = vpop.xlane.xlu0 %64
    %v66 = vmul.f32 %v54, %v55
    %v67 = vsel %vm58, %v66, 0.0
    %68 = vadd.xlane.f32.xlu0 %v67
    %v69 = vpop.xlane.xlu0 %68
    %v70 = vmul.f32 %v53, %v53
    %v71 = vsel %vm58, %v70, 0.0
    %72 = vadd.xlane.f32.xlu0 %v71
    %v73 = vpop.xlane.xlu0 %72
    %v74 = vmul.f32 %v54, %v54
    %v75 = vsel %vm58, %v74, 0.0
    %76 = vadd.xlane.f32.xlu0 %v75
    %v77 = vpop.xlane.xlu0 %76
    %v78 = vmul.f32 %v55, %v55
    %v79 = vsel %vm58, %v78, 0.0
    %80 = vadd.xlane.f32.xlu0 %v79
    %v81 = vpop.xlane.xlu0 %80
    %v82 = vmul.f32 %v56, %v56
    %v83 = vsel %vm58, %v82, 0.0
    %84 = vadd.xlane.f32.xlu0 %v83
    %v85 = vpop.xlane.xlu0 %84
    %v86 = vmax.f32 %v73, 1e-16
    %v87 = vrsqrt.pop %v86
    %v88 = vmax.f32 %v77, 1e-16
    %v89 = vrsqrt.pop %v88
    %v90 = vmax.f32 %v81, 1e-16
    %v91 = vrsqrt.pop %v90
    %v92 = vmax.f32 %v85, 1e-16
    %v93 = vrsqrt.pop %v92
    %v94 = vmul.f32 %v87, %v89
    %v95 = vmul.f32 %v61, %v94
    %v96 = vmul.f32 %v87, %v93
    %v97 = vmul.f32 %v65, %v96
    %v98 = vmul.f32 %v89, %v91
    %v99 = vmul.f32 %v69, %v98
    %v100 = vsub.f32 %v95, %v97
    %v101 = vsub.f32 1.0, %v100
    %v102 = vmax.f32 %v101, 0.0
    %v103 = vsub.f32 %v95, %v99
    %v104 = vsub.f32 1.0, %v103
    %v105 = vmax.f32 %v104, 0.0
    %v106 = vadd.f32 %v102, %v105
    %v107 = vrot.slane %v106, 4
    %v108 = vadd.f32 %v106, %v107
    %v109 = vrot.slane %v108, 2
    %v110 = vadd.f32 %v108, %v109
    %v111 = vrot.slane %v110, 1
    %v112 = vadd.f32 %v110, %v111
    %vm113 = vcmask 0
    %114 = vst.msk [vmem:[#allocation8] sm:$0x1] %vm113, %v112
    // Predicated region
    $region30: #{tpu_custom_call.1} parent=1 // pred_check
      _
    $region31: #{tpu_custom_call.1} parent=1 // pred_check_branch
      %116 = sbr.rel (0) target = $region33
    $region32: #{tpu_custom_call.1} parent=1 // pred_region
      %s118 = ssub.s32 16, 16
      %119 = vsyncadd [#allocation4], %s118
      %s121 = sshll.u32 [#allocation8], 4
      %s122 = int_to_ptr.vmem [resolvable:$true] %s121
      %124 = dma.vmem_to_hbm [thread:$0]  %s122, 16, %s4, [#allocation4]
    $region33: #{tpu_custom_call.1} parent=1 // pred_fallthru
      _
    // Predicated region
    $region34: #{tpu_custom_call.1} parent=1 // pred_check
      _
    $region35: #{tpu_custom_call.1} parent=1 // pred_check_branch
      %126 = sbr.rel (0) target = $region37
    $region36: #{tpu_custom_call.1} parent=1 // pred_region
      %127 = dma.done [#allocation4], 16
    $region37: #{tpu_custom_call.1} parent=1 // pred_fallthru
      _
    %128 = vsyncpa [#allocation3], 1
    %129 = vsyncpa [#allocation6], 1
    %130 = vsyncpa [#allocation4], 1

</llo_original>
